<compile_context>
chip_gen: v7x
topology: tpu7x:2x2x1
jax: 0.10.0
libtpu: 0.0.40
codegen_flags: <defaults>
</compile_context>

<pallas_src>
import math
import numpy as np
import jax
import jax.numpy as jnp
from jax.experimental import pallas as pl
from jax.experimental.pallas import tpu as pltpu


VMEM_LIMIT_BYTES = 32 * 1024 * 1024       # safe on v5e/v6e (128 MiB) and v7x (64 MiB)
BLOCK_BYTES_BUDGET = 2 * 1024 * 1024      # target combined input bytes per grid step


def _round_up(v, m):
    return ((v + m - 1) // m) * m


def _choose_block_slabs(ns, bytes_per_slab, budget=BLOCK_BYTES_BUDGET):
    """Largest divisor of `ns` whose combined per-step block stays within the byte budget."""
    k = max(1, min(ns, budget // max(1, bytes_per_slab)))
    while ns % k != 0:
        k -= 1
    return k


# ----------------------------------------------------------------------------
# Pallas kernels
# ----------------------------------------------------------------------------
def _transform_kernel(x_ref, aux_ref, pred_ref):
    """Decode pred bbox for a block of K (batch, anchor) slabs.
       x_ref:    (K, tc, FFp) raw logits (only channels 0..3 used)
       aux_ref:  (K, 4, FFp)  rows = [grid_x, grid_y, anchor_w, anchor_h]
       pred_ref: (K, 4, FFp)  decoded bbox (cx, cy, w, h)."""
    x = x_ref[:, 0:4, :].astype(jnp.float32)
    aux = aux_ref[...]
    # sigmoid via EUP exp + approx reciprocal (keeps the divide off the VPU)
    e = jnp.exp(-x[:, 0:2, :])
    sig_xy = pl.reciprocal(1.0 + e, approx=True)
    pred_ref[:, 0:2, :] = sig_xy + aux[:, 0:2, :]
    # reference module computes exp(raw_wh * anchor_wh) — matched exactly
    pred_ref[:, 2:4, :] = jnp.exp(x[:, 2:4, :] * aux[:, 2:4, :])


def _loss_kernel(x_ref, t_ref, m_ref, loss_ref, acc_ref):
    """Masked BCE/MSE partial sums for a block of K slabs.
       x_ref: (K, C, FFp) raw logits; t_ref: (K, C, FFp) dense targets;
       m_ref: (K, 3, FFp) packed [obj_mask, target_mask, target_scale];
       loss_ref: SMEM (6,) = [loss, loss_xy, loss_wh, loss_obj, loss_cls, loss_l2];
       acc_ref: VMEM (8, FFp) per-lane partial sums
                (rows: 0=xy, 1=wh_sq, 2=obj, 3=cls, 4=l2_rest)."""
    i = pl.program_id(0)

    @pl.when(i == 0)
    def _init():
        acc_ref[...] = jnp.zeros_like(acc_ref)

    x = x_ref[...].astype(jnp.float32)
    t = t_ref[...]
    obj = m_ref[:, 0:1, :]       # (K, 1, FFp), 0/1
    tm = m_ref[:, 1:2, :]        # (K, 1, FFp), 0/1
    ts = m_ref[:, 2:3, :]        # (K, 1, FFp)

    def sig_and_bce(xs, tt):
        # Logit-space BCE with F.binary_cross_entropy's -100 clamp on each log term.
        # Stable softplus via exp(-|x|); sigmoid for the L2 term reuses the same exp.
        ax = jnp.abs(xs)
        e = jnp.exp(-ax)
        lg = jnp.log(1.0 + e)
        r = pl.reciprocal(1.0 + e, approx=True)
        sig = jnp.where(xs >= 0.0, r, e * r)
        sp_neg = lg + jnp.maximum(-xs, 0.0)        # softplus(-x) = -log(sigmoid(x))
        sp_pos = lg + jnp.maximum(xs, 0.0)         # softplus(x)  = -log(1 - sigmoid(x))
        bce = tt * jnp.minimum(sp_neg, 100.0) + (1.0 - tt) * jnp.minimum(sp_pos, 100.0)
        return sig, bce

    def lane_sum(v):                               # (K, c, FFp) -> (1, FFp), keep lane axis
        return jnp.sum(jnp.sum(v, axis=0), axis=0, keepdims=True)

    # xy (channels 0,1): BCE on sigmoid, weight = target_scale^2, masked by target_mask
    s01, b01 = sig_and_bce(x[:, 0:2, :], t[:, 0:2, :])
    d01 = s01 - t[:, 0:2, :]
    # wh (channels 2,3): raw logits, masked on both sides by target_mask*target_scale (MSE)
    d23 = (x[:, 2:4, :] - t[:, 2:4, :]) * (tm * ts)
    # obj (channel 4): BCE on sigmoid, masked by obj_mask
    s4, b4 = sig_and_bce(x[:, 4:5, :], t[:, 4:5, :])
    d4 = s4 - t[:, 4:5, :]

    acc_ref[0:1, :] += lane_sum(ts * ts * tm * b01)
    acc_ref[1:2, :] += lane_sum(d23 * d23)
    acc_ref[2:3, :] += lane_sum(obj * b4)
    l2_rest = lane_sum(tm * d01 * d01) + lane_sum(obj * d4 * d4)

    if x.shape[1] > 5:   # class channels (5:)
        s5, b5 = sig_and_bce(x[:, 5:, :], t[:, 5:, :])
        d5 = s5 - t[:, 5:, :]
        acc_ref[3:4, :] += lane_sum(tm * b5)
        l2_rest = l2_rest + lane_sum(tm * d5 * d5)

    acc_ref[4:5, :] += l2_rest

    @pl.when(i == pl.num_programs(0) - 1)
    def _final():
        l_xy = jnp.sum(acc_ref[0:1, :])
        s23 = jnp.sum(acc_ref[1:2, :])
        l_obj = jnp.sum(acc_ref[2:3, :])
        l_cls = jnp.sum(acc_ref[3:4, :])
        l2r = jnp.sum(acc_ref[4:5, :])
        l_wh = 0.5 * s23
        loss_ref[0] = l_xy + l_wh + l_obj + l_cls
        loss_ref[1] = l_xy
        loss_ref[2] = l_wh
        loss_ref[3] = l_obj
        loss_ref[4] = l_cls
        loss_ref[5] = l2r + s23


# ----------------------------------------------------------------------------
# JAX glue: bboxes_iou and the vectorized data-dependent target preparation.
# ----------------------------------------------------------------------------
def bboxes_iou_jax(a, b, ciou=False):
    """Reproduction of pytorch-YOLOv4 `bboxes_iou` (default xyxy=True path, as in the spec)."""
    tl = jnp.maximum(a[:, None, :2], b[None, :, :2])
    br = jnp.minimum(a[:, None, 2:], b[None, :, 2:])
    con_tl = jnp.minimum(a[:, None, :2], b[None, :, :2])
    con_br = jnp.maximum(a[:, None, 2:], b[None, :, 2:])
    rho2 = (((a[:, None, 0] + a[:, None, 2]) - (b[None, :, 0] + b[None, :, 2])) ** 2 / 4.0
            + ((a[:, None, 1] + a[:, None, 3]) - (b[None, :, 1] + b[None, :, 3])) ** 2 / 4.0)
    w1 = a[:, 2] - a[:, 0]
    h1 = a[:, 3] - a[:, 1]
    w2 = b[:, 2] - b[:, 0]
    h2 = b[:, 3] - b[:, 1]
    area_a = jnp.prod(a[:, 2:] - a[:, :2], axis=1)
    area_b = jnp.prod(b[:, 2:] - b[:, :2], axis=1)
    en = jnp.prod((tl < br).astype(jnp.float32), axis=2)
    area_i = jnp.prod(br - tl, axis=2) * en
    area_u = area_a[:, None] + area_b[None, :] - area_i
    iou = area_i / area_u
    if ciou:
        c2 = jnp.sum((con_br - con_tl) ** 2, axis=2) + 1e-16
        v = (4.0 / math.pi ** 2) * (jnp.arctan(w1 / h1)[:, None] - jnp.arctan(w2 / h2)[None, :]) ** 2
        alpha = v / (1.0 - iou + v)
        return iou - (rho2 / c2 + v * alpha)
    return iou


class DetectionLossPallas:
    def __init__(self, n_classes, n_anchors, image_size, batch):
        self.n_classes = n_classes
        self.n_anchors = n_anchors
        self.anchors = [[13, 16], [28, 32], [62, 35]]
        self.anchor_masks = [[0, 1, 2]]
        self.strides = [8]
        self.ignore_thre = 0.5
        self.image_size = image_size
        self.batch = batch
        self.masked_anchors, self.masked_anchors_j = [], []
        self.ref_anchors, self.aux = [], []
        for i in range(len(self.strides)):
            all_anchors_grid = [(w / image_size / self.strides[i], h / image_size / self.strides[i])
                                for w, h in self.anchors]
            masked_anchors = np.array([all_anchors_grid[j] for j in self.anchor_masks[i]],
                                      dtype=np.float32)
            ref_anchors = np.zeros((len(all_anchors_grid), 4), dtype=np.float32)
            ref_anchors[:, 2:] = np.array(all_anchors_grid, dtype=np.float32)
            fsize = image_size // self.strides[i]
            FF = fsize * fsize
            FFp = _round_up(FF, 128)
            # packed decode auxiliaries, channel-major & lane-padded:
            # rows = [grid_x (ix), grid_y (jy), anchor_w, anchor_h]; lane index = jy*fsize + ix
            aux = np.zeros((self.n_anchors, 4, FFp), dtype=np.float32)
            gx = np.tile(np.arange(fsize, dtype=np.float32), fsize)
            gy = np.repeat(np.arange(fsize, dtype=np.float32), fsize)
            aux[:, 0, :FF] = gx[None, :]
            aux[:, 1, :FF] = gy[None, :]
            aux[:, 2, :FF] = masked_anchors[:, 0][:, None]
            aux[:, 3, :FF] = masked_anchors[:, 1][:, None]
            self.masked_anchors.append(masked_anchors)
            self.masked_anchors_j.append(jnp.asarray(masked_anchors))
            self.ref_anchors.append(jnp.asarray(ref_anchors))
            self.aux.append(jnp.asarray(aux))

    # TODO(synk): prepare_target is a data-dependent, variable-box-count anchor match +
    # scatter; it has no dense Pallas equivalent and stays in (vectorized, vmapped) JAX glue.
    def _prepare_one(self, lab, valid, pred_img, fsize, n_ch, layer_id):
        """Per-image anchor matching + target scatter (vmapped over the batch).
           lab: (M, 5) padded labels [x1, y1, w, h, cls]; valid: (M,) bool; pred_img: (A, 4, FF)."""
        A = self.n_anchors
        stride = self.strides[layer_id]
        ref_anchors = self.ref_anchors[layer_id]
        masked_anchors = self.masked_anchors_j[layer_id]
        am = self.anchor_masks[layer_id]

        lab = lab.astype(jnp.float32)
        label_x = (lab[:, 0] + lab[:, 2]) / (stride * 2)
        label_y = (lab[:, 1] + lab[:, 3]) / (stride * 2)
        label_w = lab[:, 2] / stride
        label_h = lab[:, 3] / stride
        label_i = label_x.astype(jnp.int32)
        label_j = label_y.astype(jnp.int32)

        zeros_n = jnp.zeros_like(label_w)
        box_wh = jnp.stack([zeros_n, zeros_n, label_w, label_h], axis=1)
        anchor_ious = bboxes_iou_jax(box_wh, ref_anchors, ciou=True)         # (M, n_ref)
        best_n_all = jnp.argmax(anchor_ious, axis=1)
        best_n = best_n_all % A
        best_n_mask = ((best_n_all == am[0]) | (best_n_all == am[1])
                       | (best_n_all == am[2])) & valid
        has_match = jnp.any(best_n_mask)

        # pred-IoU based ignore mask; if no anchor matched, obj_mask stays all ones (per spec)
        pred_boxes = jnp.transpose(pred_img, (0, 2, 1)).reshape(-1, 4)        # (A*FF, 4)
        label_box = jnp.stack([label_x, label_y, label_w, label_h], axis=1)
        pred_ious = bboxes_iou_jax(pred_boxes, label_box)                     # (A*FF, M)
        pred_ious = jnp.where(valid[None, :], pred_ious, -1.0)                # drop padded boxes
        pred_best = jnp.max(pred_ious, axis=1) > self.ignore_thre
        obj_from_pred = (~pred_best).astype(jnp.float32).reshape(A, fsize, fsize)
        obj_b = jnp.where(has_match, obj_from_pred,
                          jnp.ones((A, fsize, fsize), jnp.float32))

        # per-box scatter values; unmatched / padded boxes dropped via OOB anchor index
        a_idx = jnp.where(best_n_mask, best_n, A)
        ones_n = jnp.ones_like(label_x)
        frac = label_x - label_i.astype(jnp.float32)
        tw = jnp.log(label_w / masked_anchors[best_n, 0] + 1e-16)
        th = jnp.log(label_h / masked_anchors[best_n, 1] + 1e-16)
        scale = jnp.sqrt(2.0 - label_w * label_h / fsize / fsize)
        cls_idx = lab[:, 4].astype(jnp.int32)

        tm_b = jnp.zeros((A, fsize, fsize), jnp.float32)
        ts_b = jnp.zeros((A, fsize, fsize), jnp.float32)
        tgt_b = jnp.zeros((A, n_ch, fsize, fsize), jnp.float32)

        obj_b = obj_b.at[a_idx, label_j, label_i].set(ones_n, mode='drop')
        tm_b = tm_b.at[a_idx, label_j, label_i].set(ones_n, mode='drop')
        ts_b = ts_b.at[a_idx, label_j, label_i].set(scale, mode='drop')

        # fused per-box target scatter (6 channels in one scatter)
        M = lab.shape[0]
        ch_idx = jnp.concatenate(
            [jnp.broadcast_to(jnp.arange(5, dtype=jnp.int32), (M, 5)),
             (5 + cls_idx)[:, None]], axis=1)                                 # (M, 6)
        # NOTE: the reference fills BOTH xy target channels with the label_x fraction.
        vals = jnp.stack([frac, frac, tw, th, ones_n, ones_n], axis=1)        # (M, 6)
        tgt_b = tgt_b.at[a_idx[:, None], ch_idx,
                         label_j[:, None], label_i[:, None]].set(vals, mode='drop')
        return obj_b, tm_b, ts_b, tgt_b

    def prepare_targets(self, pred_cm, labels, batchsize, fsize, n_ch, layer_id, FFp):
        A = self.n_anchors
        FF = fsize * fsize
        NS = batchsize * A

        counts = [int(lab.shape[0]) for lab in labels]
        max_n = max(counts) if counts else 0
        if max_n == 0:
            obj = jnp.ones((NS, 1, FF), jnp.float32)
            rest = jnp.zeros((NS, 2, FF), jnp.float32)
            masks = jnp.concatenate([obj, rest], axis=1)
            target = jnp.zeros((NS, n_ch, FF), jnp.float32)
        else:
            labs = jnp.stack([
                jnp.pad(lab.astype(jnp.float32), ((0, max_n - int(lab.shape[0])), (0, 0)))
                for lab in labels])
            valid = jnp.asarray(
                np.array([[j < c for j in range(max_n)] for c in counts], dtype=bool))
            pred_img = pred_cm[:, :, :FF].reshape(batchsize, A, 4, FF)

            prep = jax.vmap(
                lambda l, v, p: self._prepare_one(l, v, p, fsize, n_ch, layer_id))
            obj_b, tm_b, ts_b, tgt_b = prep(labs, valid, pred_img)
            masks = jnp.stack([obj_b, tm_b, ts_b], axis=2).reshape(NS, 3, FF)
            target = tgt_b.reshape(NS, n_ch, FF)

        if FFp != FF:
            pad = ((0, 0), (0, 0), (0, FFp - FF))
            masks = jnp.pad(masks, pad)     # padded lanes: zero masks => zero loss contribution
            target = jnp.pad(target, pad)
        return masks, target

    def forward(self, x, labels):
        loss = loss_xy = loss_wh = loss_obj = loss_cls = loss_l2 = 0.0
        A = self.n_anchors
        for layer_id in range(len(self.anchor_masks)):
            output = x[layer_id]                       # NCHW: (B, A*C, F, F)
            B = output.shape[0]
            F_ = output.shape[2]
            C = 5 + self.n_classes
            FF = F_ * F_
            FFp = _round_up(FF, 128)                   # lane-dense: full vregs, unmasked stores
            NS = B * A                                 # number of (batch, anchor) slabs

            # pure reshape (no transpose) to channel-major slabs, native dtype
            # (upcast to f32 happens in-register inside the kernels)
            x_cm = output.reshape(NS, C, FF)
            if FFp != FF:
                x_cm = jnp.pad(x_cm, ((0, 0), (0, 0), (0, FFp - FF)))

            aux = jnp.tile(self.aux[layer_id], (B, 1, 1))          # (NS, 4, FFp), resident per block
            tc = C if C <= 8 else 8                                # decode only needs channels 0..3
            itemsize = x_cm.dtype.itemsize

            # ---- kernel 1: bbox decode, slabs folded into large lane-dense blocks ----
            Kt = _choose_block_slabs(NS, (tc * itemsize + 8 * 4) * FFp)
            pred_cm = pl.pallas_call(
                _transform_kernel,
                out_shape=jax.ShapeDtypeStruct((NS, 4, FFp), jnp.float32),
                grid_spec=pltpu.PrefetchScalarGridSpec(
                    num_scalar_prefetch=0,
                    grid=(NS // Kt,),
                    in_specs=[
                        pl.BlockSpec((Kt, tc, FFp), lambda i: (i, 0, 0)),
                        pl.BlockSpec((Kt, 4, FFp), lambda i: (i, 0, 0)),
                    ],
                    out_specs=pl.BlockSpec((Kt, 4, FFp), lambda i: (i, 0, 0)),
                ),
                compiler_params=pltpu.CompilerParams(
                    dimension_semantics=("parallel",),
                    vmem_limit_bytes=VMEM_LIMIT_BYTES),
            )(x_cm, aux)

            masks, target = self.prepare_targets(
                pred_cm, labels, B, F_, C, layer_id, FFp)

            # ---- kernel 2: masked BCE/MSE loss reduction, accumulated across the grid ----
            Kl = _choose_block_slabs(NS, (C * itemsize + (C + 3) * 4) * FFp)
            losses = pl.pallas_call(
                _loss_kernel,
                out_shape=jax.ShapeDtypeStruct((6,), jnp.float32),
                grid_spec=pltpu.PrefetchScalarGridSpec(
                    num_scalar_prefetch=0,
                    grid=(NS // Kl,),
                    in_specs=[
                        pl.BlockSpec((Kl, C, FFp), lambda i: (i, 0, 0)),   # raw logits
                        pl.BlockSpec((Kl, C, FFp), lambda i: (i, 0, 0)),   # dense target
                        pl.BlockSpec((Kl, 3, FFp), lambda i: (i, 0, 0)),   # packed [obj, tm, ts]
                    ],
                    out_specs=pl.BlockSpec(memory_space=pltpu.MemorySpace.SMEM),
                    scratch_shapes=[pltpu.VMEM((8, FFp), jnp.float32)],
                ),
                compiler_params=pltpu.CompilerParams(
                    dimension_semantics=("arbitrary",),
                    vmem_limit_bytes=VMEM_LIMIT_BYTES),
            )(x_cm, target, masks)

            loss = loss + losses[0]
            loss_xy = loss_xy + losses[1]
            loss_wh = loss_wh + losses[2]
            loss_obj = loss_obj + losses[3]
            loss_cls = loss_cls + losses[4]
            loss_l2 = loss_l2 + losses[5]
        return loss, loss_xy, loss_wh, loss_obj, loss_cls, loss_l2


if __name__ == "__main__":
    n_classes = 3
    n_anchors = 3
    image_size = 64
    batch = 2
    stride = 8
    fsize = image_size // stride          # 8
    n_ch = 5 + n_classes                  # 8

    key = jax.random.PRNGKey(0)
    kx, ka, kb = jax.random.split(key, 3)
    # raw detection head output (NCHW), like the conv output fed to the loss
    x = jax.random.normal(kx, (batch, n_anchors * n_ch, fsize, fsize), dtype=jnp.float32)

    # deterministic labels: per-image (n_boxes, 5) = [x1, y1, w, h, class]
    labels = []
    for kk in (ka, kb):
        k1, k2, k3 = jax.random.split(kk, 3)
        n_boxes = 3
        xy1 = jax.random.uniform(k1, (n_boxes, 2), minval=4.0, maxval=36.0)
        wh = jax.random.uniform(k2, (n_boxes, 2), minval=8.0, maxval=20.0)
        cls = jax.random.randint(k3, (n_boxes, 1), 0, n_classes).astype(jnp.float32)
        labels.append(jnp.concatenate([xy1, wh, cls], axis=1))

    module = DetectionLossPallas(n_classes, n_anchors, image_size, batch)
    out = module.forward([x], labels)
    out = jax.block_until_ready(out)
    print("KERNEL_OK")
</pallas_src>

<mosaic_0001>
module attributes {stable_mosaic.version = 11 : i64} {
  func.func @_transform_kernel(%arg0: i32, %arg1: memref<6x8x128xf32, #tpu.memory_space<vmem>>, %arg2: memref<6x4x128xf32, #tpu.memory_space<vmem>>, %arg3: memref<6x4x128xf32, #tpu.memory_space<vmem>>) attributes {dimension_semantics = [#tpu.dimension_semantics<parallel>], iteration_bounds = array<i64: 1>, scalar_prefetch = 0 : i64, scratch_operands = 0 : i64, tpu.core_type = #tpu.core_type<tc>, window_params = [{transform_indices = @transform_0, window_bounds = array<i64: 6, 8, 128>}, {transform_indices = @transform_1, window_bounds = array<i64: 6, 4, 128>}, {transform_indices = @transform_2, window_bounds = array<i64: 6, 4, 128>}]} {
    %c0 = arith.constant 0 : index
    %c0_0 = arith.constant 0 : index
    %c0_1 = arith.constant 0 : index
    %0 = vector.load %arg1[%c0, %c0_0, %c0_1] : memref<6x8x128xf32, #tpu.memory_space<vmem>>, vector<6x4x128xf32>
    %c0_2 = arith.constant 0 : index
    %c0_3 = arith.constant 0 : index
    %c0_4 = arith.constant 0 : index
    %1 = vector.load %arg2[%c0_2, %c0_3, %c0_4] : memref<6x4x128xf32, #tpu.memory_space<vmem>>, vector<6x4x128xf32>
    %2 = vector.extract_strided_slice %0 {offsets = [0, 0, 0], sizes = [6, 2, 128], strides = [1, 1, 1]} : vector<6x4x128xf32> to vector<6x2x128xf32>
    %cst = arith.constant 0.000000e+00 : f32
    %3 = vector.broadcast %cst : f32 to vector<6x2x128xf32>
    %4 = arith.subf %3, %2 : vector<6x2x128xf32>
    %5 = math.exp %4 : vector<6x2x128xf32>
    %cst_5 = arith.constant 1.000000e+00 : f32
    %6 = vector.broadcast %cst_5 : f32 to vector<6x2x128xf32>
    %7 = arith.addf %6, %5 : vector<6x2x128xf32>
    %8 = tpu.reciprocal %7 {approx = true} : vector<6x2x128xf32> -> vector<6x2x128xf32>
    %9 = vector.extract_strided_slice %1 {offsets = [0, 0, 0], sizes = [6, 2, 128], strides = [1, 1, 1]} : vector<6x4x128xf32> to vector<6x2x128xf32>
    %10 = arith.addf %8, %9 : vector<6x2x128xf32>
    %c0_6 = arith.constant 0 : index
    %c0_7 = arith.constant 0 : index
    %c0_8 = arith.constant 0 : index
    %11 = vector.load %arg3[%c0_6, %c0_7, %c0_8] : memref<6x4x128xf32, #tpu.memory_space<vmem>>, vector<6x2x128xf32>
    tpu.vector_store %arg3[%c0_6, %c0_7, %c0_8], %10 {strides = array<i32>} : memref<6x4x128xf32, #tpu.memory_space<vmem>>, vector<6x2x128xf32>,
    %12 = vector.extract_strided_slice %0 {offsets = [0, 2, 0], sizes = [6, 2, 128], strides = [1, 1, 1]} : vector<6x4x128xf32> to vector<6x2x128xf32>
    %13 = vector.extract_strided_slice %1 {offsets = [0, 2, 0], sizes = [6, 2, 128], strides = [1, 1, 1]} : vector<6x4x128xf32> to vector<6x2x128xf32>
    %14 = arith.mulf %12, %13 : vector<6x2x128xf32>
    %15 = math.exp %14 : vector<6x2x128xf32>
    %c0_9 = arith.constant 0 : index
    %c2 = arith.constant 2 : index
    %c0_10 = arith.constant 0 : index
    %16 = vector.load %arg3[%c0_9, %c2, %c0_10] : memref<6x4x128xf32, #tpu.memory_space<vmem>>, vector<6x2x128xf32>
    tpu.vector_store %arg3[%c0_9, %c2, %c0_10], %15 {strides = array<i32>} : memref<6x4x128xf32, #tpu.memory_space<vmem>>, vector<6x2x128xf32>,
    return
  }
  func.func @transform_0(%arg0: i32) -> (i32, i32, i32) {
    %c0_i32 = arith.constant 0 : i32
    %c0_i32_0 = arith.constant 0 : i32
    %c0_i32_1 = arith.constant 0 : i32
    return %arg0, %c0_i32, %c0_i32_0 : i32, i32, i32
  }
  func.func @transform_1(%arg0: i32) -> (i32, i32, i32) {
    %c0_i32 = arith.constant 0 : i32
    %c0_i32_0 = arith.constant 0 : i32
    %c0_i32_1 = arith.constant 0 : i32
    return %arg0, %c0_i32, %c0_i32_0 : i32, i32, i32
  }
  func.func @transform_2(%arg0: i32) -> (i32, i32, i32) {
    %c0_i32 = arith.constant 0 : i32
    %c0_i32_0 = arith.constant 0 : i32
    %c0_i32_1 = arith.constant 0 : i32
    return %arg0, %c0_i32, %c0_i32_0 : i32, i32, i32
  }
}

</mosaic_0001>

<llo_original>
// kernel: tpu_custom_call.1
$region0: #{tpu_custom_call.1}
  #allocation0 [shape = 'u32[]', space=smem, size = 0x4, offset = 0x4, fixed_abs, tag = 'smem constant byte address 0x4 - core index']
  #allocation1 [shape = 'u32[144,128]{1,0:T(1,128)}', space=vmem, size = 0x12000, scoped, tag = 'internal scratch']
  %s0 = inlined_call_operand.hbm [shape: f32[6,8,128], index: 0, kind: input, shape index: {}]
  %s1 = inlined_call_operand.hbm [shape: f32[6,4,128], index: 1, kind: input, shape index: {}]
  %s2 = inlined_call_operand.hbm [shape: f32[6,4,128], index: 2, kind: output, shape index: {}]
  %s3 = sld [smem:[#allocation0]]
  $region26: #{tpu_custom_call.1} parent=0
    _
  %s5 = ssub.s32 1, %s3
  %s6 = scalar_select 0, %s5, %s3
  $region1: #{tpu_custom_call.1} parent=0
    #allocation2 [shape = 'u8[24576]{0}', space=vmem, size = 0x6000, scoped, tag = 'input window, operand 0, single buffered']
    #allocation3 [shape = 's32[1]{0}', space=sflag, size = 0x4, scoped, tag = 'scoped memory for tpu_custom_call.1']
    #allocation4 [shape = 's32[1]{0}', space=sflag, size = 0x4, scoped, tag = 'scoped memory for tpu_custom_call.1']
    #allocation5 [shape = 'u8[12288]{0}', space=vmem, size = 0x3000, scoped, tag = 'input window, operand 1, single buffered']
    #allocation6 [shape = 's32[1]{0}', space=sflag, size = 0x4, scoped, tag = 'scoped memory for tpu_custom_call.1']
    #allocation7 [shape = 'u8[12288]{0}', space=vmem, size = 0x3000, scoped, tag = 'output window, operand 0, single buffered']
    %7 = vsyncpa [#allocation3], 0
    %8 = vsyncpa [#allocation6], 0
    %9 = vsyncpa [#allocation4], 0
    // Predicated region
    $region2: #{tpu_custom_call.1} parent=1 // pred_check
      _
    $region3: #{tpu_custom_call.1} parent=1 // pred_check_branch
      %11 = sbr.rel (0) target = $region5
    $region4: #{tpu_custom_call.1} parent=1 // pred_region
      %s13 = ssub.s32 768, 768
      %14 = vsyncadd [#allocation3], %s13
      %s15 = sshll.u32 [#allocation2], 4
      %s16 = int_to_ptr.vmem [resolvable:$true] %s15
      %21 = dma.hbm_to_vmem [thread:$0]  %s0, 768, %s16, [#allocation3], 128, 128, 8
    $region5: #{tpu_custom_call.1} parent=1 // pred_fallthru
      _
    // Predicated region
    $region6: #{tpu_custom_call.1} parent=1 // pred_check
      _
    $region7: #{tpu_custom_call.1} parent=1 // pred_check_branch
      %23 = sbr.rel (0) target = $region9
    $region8: #{tpu_custom_call.1} parent=1 // pred_region
      %s25 = ssub.s32 384, 384
      %26 = vsyncadd [#allocation6], %s25
      %s27 = sshll.u32 [#allocation5], 4
      %s28 = int_to_ptr.vmem [resolvable:$true] %s27
      %33 = dma.hbm_to_vmem [thread:$0]  %s1, 384, %s28, [#allocation6], 64, 64, 4
    $region9: #{tpu_custom_call.1} parent=1 // pred_fallthru
      _
    // Predicated region
    $region10: #{tpu_custom_call.1} parent=1 // pred_check
      _
    $region11: #{tpu_custom_call.1} parent=1 // pred_check_branch
      %35 = sbr.rel (0) target = $region13
    $region12: #{tpu_custom_call.1} parent=1 // pred_region
      %36 = dma.done [#allocation3], 768
    $region13: #{tpu_custom_call.1} parent=1 // pred_fallthru
      _
    // Predicated region
    $region14: #{tpu_custom_call.1} parent=1 // pred_check
      _
    $region15: #{tpu_custom_call.1} parent=1 // pred_check_branch
      %38 = sbr.rel (0) target = $region17
    $region16: #{tpu_custom_call.1} parent=1 // pred_region
      %39 = dma.done [#allocation6], 384
    $region17: #{tpu_custom_call.1} parent=1 // pred_fallthru
      _
    %v40 = vld [vmem:[#allocation2] sm:$0xf]
    %v41 = vld [vmem:[#allocation2 + $0x8] sm:$0xf]
    %v42 = vld [vmem:[#allocation2 + $0x10] sm:$0xf]
    %v43 = vld [vmem:[#allocation2 + $0x18] sm:$0xf]
    %v44 = vld [vmem:[#allocation2 + $0x20] sm:$0xf]
    %v45 = vld [vmem:[#allocation2 + $0x28] sm:$0xf]
    %v46 = vld [vmem:[#allocation5] sm:$0xf]
    %v47 = vld [vmem:[#allocation5 + $0x4] sm:$0xf]
    %v48 = vld [vmem:[#allocation5 + $0x8] sm:$0xf]
    %v49 = vld [vmem:[#allocation5 + $0xc] sm:$0xf]
    %v50 = vld [vmem:[#allocation5 + $0x10] sm:$0xf]
    %v51 = vld [vmem:[#allocation5 + $0x14] sm:$0xf]
    %v52 = vsub.f32 0.0, %v40
    %v53 = vsub.f32 0.0, %v41
    %v54 = vsub.f32 0.0, %v42
    %v55 = vsub.f32 0.0, %v43
    %v56 = vsub.f32 0.0, %v44
    %v57 = vsub.f32 0.0, %v45
    %v58 = vmul.f32 %v52, 1.442695
    %v59 = vpow.pop %v58
    %v60 = vmul.f32 %v53, 1.442695
    %v61 = vpow.pop %v60
    %v62 = vmul.f32 %v54, 1.442695
    %v63 = vpow.pop %v62
    %v64 = vmul.f32 %v55, 1.442695
    %v65 = vpow.pop %v64
    %v66 = vmul.f32 %v56, 1.442695
    %v67 = vpow.pop %v66
    %v68 = vmul.f32 %v57, 1.442695
    %v69 = vpow.pop %v68
    %v70 = vadd.f32 %v59, 1.0
    %v71 = vadd.f32 %v61, 1.0
    %v72 = vadd.f32 %v63, 1.0
    %v73 = vadd.f32 %v65, 1.0
    %v74 = vadd.f32 %v67, 1.0
    %v75 = vadd.f32 %v69, 1.0
    %v76 = vrcp.pop %v70
    %v77 = vrcp.pop %v71
    %v78 = vrcp.pop %v72
    %v79 = vrcp.pop %v73
    %v80 = vrcp.pop %v74
    %v81 = vrcp.pop %v75
    %v82 = vadd.f32 %v76, %v46
    %v83 = vadd.f32 %v77, %v47
    %v84 = vadd.f32 %v78, %v48
    %v85 = vadd.f32 %v79, %v49
    %v86 = vadd.f32 %v80, %v50
    %v87 = vadd.f32 %v81, %v51
    %88 = vst [vmem:[#allocation7] sm:$0x3] %v82
    %89 = vst [vmem:[#allocation7 + $0x4] sm:$0x3] %v83
    %90 = vst [vmem:[#allocation7 + $0x8] sm:$0x3] %v84
    %91 = vst [vmem:[#allocation7 + $0xc] sm:$0x3] %v85
    %92 = vst [vmem:[#allocation7 + $0x10] sm:$0x3] %v86
    %93 = vst [vmem:[#allocation7 + $0x14] sm:$0x3] %v87
    %v94 = vmul.f32 %v40, %v46
    %v95 = vmul.f32 %v41, %v47
    %v96 = vmul.f32 %v42, %v48
    %v97 = vmul.f32 %v43, %v49
    %v98 = vmul.f32 %v44, %v50
    %v99 = vmul.f32 %v45, %v51
    %v100 = vmul.f32 %v94, 1.442695
    %v101 = vpow.pop %v100
    %v102 = vmul.f32 %v95, 1.442695
    %v103 = vpow.pop %v102
    %v104 = vmul.f32 %v96, 1.442695
    %v105 = vpow.pop %v104
    %v106 = vmul.f32 %v97, 1.442695
    %v107 = vpow.pop %v106
    %v108 = vmul.f32 %v98, 1.442695
    %v109 = vpow.pop %v108
    %v110 = vmul.f32 %v99, 1.442695
    %v111 = vpow.pop %v110
    %112 = vst [vmem:[#allocation7] sm:$0xc] %v101
    %113 = vst [vmem:[#allocation7 + $0x4] sm:$0xc] %v103
    %114 = vst [vmem:[#allocation7 + $0x8] sm:$0xc] %v105
    %115 = vst [vmem:[#allocation7 + $0xc] sm:$0xc] %v107
    %116 = vst [vmem:[#allocation7 + $0x10] sm:$0xc] %v109
    %117 = vst [vmem:[#allocation7 + $0x14] sm:$0xc] %v111
    // Predicated region
    $region18: #{tpu_custom_call.1} parent=1 // pred_check
      _
    $region19: #{tpu_custom_call.1} parent=1 // pred_check_branch
      %119 = sbr.rel (0) target = $region21
    $region20: #{tpu_custom_call.1} parent=1 // pred_region
      %s121 = ssub.s32 384, 384
      %122 = vsyncadd [#allocation4], %s121
      %s123 = sshll.u32 [#allocation7], 4
      %s124 = int_to_ptr.vmem [resolvable:$true] %s123
      %129 = dma.vmem_to_hbm [thread:$0]  %s124, 384, %s2, [#allocation4], 64, 64, 4
    $region21: #{tpu_custom_call.1} parent=1 // pred_fallthru
      _
    // Predicated region
    $region22: #{tpu_custom_call.1} parent=1 // pred_check
      _
    $region23: #{tpu_custom_call.1} parent=1 // pred_check_branch
      %131 = sbr.rel (0) target = $region25
    $region24: #{tpu_custom_call.1} parent=1 // pred_region
      %132 = dma.done [#allocation4], 384
    $region25: #{tpu_custom_call.1} parent=1 // pred_fallthru
      _
    %133 = vsyncpa [#allocation3], 1
    %134 = vsyncpa [#allocation6], 1
    %135 = vsyncpa [#allocation4], 1

</llo_original>
